<compile_context>
chip_gen: v5e
topology: v5e:2x2
jax: 0.10.0
libtpu: 0.0.40
codegen_flags: <defaults>
</compile_context>

<pallas_src>
import jax
import jax.numpy as jnp
from jax.experimental import pallas as pl
from jax.experimental.pallas import tpu as pltpu


def _round_up(x, m):
    return ((x + m - 1) // m) * m


def _make_kernel(n_taps, tb, tl, e, fn_pad, l_total, fuse_taps):
    """Grid: (batch_tiles, l_tiles); l is the reduction ("arbitrary") axis.

    Refs:
      x_ref   : (TB, TL_in, E)      embedded tokens incl. n_taps-1 halo rows
      wc_ref  : (n_taps*E, Fn_pad)  stacked conv weight (all filter sizes)
      w12_ref : (Fn_pad, C_pad)     folded fc1 @ fc2 weight
      b12_ref : (1, C_pad)          folded bias (conv + fc1 + fc2)
      out_ref : (TB, C_pad)         lane-dense padded logits (f32)
      rmax_ref: (TB, Fn_pad) f32    running max-pool across L tiles
    """
    needs_mask = (l_total % tl) != 0

    def kernel(x_ref, wc_ref, w12_ref, b12_ref, out_ref, rmax_ref):
        li = pl.program_id(1)
        x = x_ref[...]                                    # (TB, TL_in, E)

        if fuse_taps:
            # E is lane-aligned: in-kernel im2col -> ONE MXU matmul with
            # contraction n_taps*E (concat of 128-lane groups is cheap).
            xcol = jnp.concatenate([x[:, k:k + tl, :] for k in range(n_taps)],
                                   axis=-1).reshape(tb * tl, n_taps * e)
            acc = jnp.dot(xcol, wc_ref[...], preferred_element_type=jnp.float32)
        else:
            # E not a multiple of 128: a lane-misaligned concat would burn XLU
            # shifts, so fold the tap combination into the MXU accumulate path.
            acc = jnp.zeros((tb * tl, fn_pad), jnp.float32)
            for k in range(n_taps):
                acc = acc + jnp.dot(x[:, k:k + tl, :].reshape(tb * tl, e),
                                    wc_ref[k * e:(k + 1) * e, :],
                                    preferred_element_type=jnp.float32)

        acc = acc.reshape(tb, tl, fn_pad)
        if needs_mask:
            # Only the last L tile has conv rows past the true sequence end;
            # exclude them from the max (conv bias is added later via b12, so
            # the max/bias commutation still holds).
            pos = li * tl + jax.lax.broadcasted_iota(jnp.int32, (tl, fn_pad), 0)
            acc = jnp.where((pos < l_total)[None], acc, -jnp.inf)
        tile_max = jnp.max(acc, axis=1)                   # (TB, Fn_pad)

        @pl.when(li == 0)
        def _():
            rmax_ref[...] = tile_max

        @pl.when(li > 0)
        def _():
            rmax_ref[...] = jnp.maximum(rmax_ref[...], tile_max)

        @pl.when(li == pl.num_programs(1) - 1)
        def _():
            # Full-sequence max-pool done; conv bias + fc1 + fc2 collapse to a
            # single matmul + bias because dropout is inference-mode identity.
            logits = jnp.dot(rmax_ref[...].astype(w12_ref.dtype), w12_ref[...],
                             preferred_element_type=jnp.float32) + b12_ref[...]
            out_ref[...] = logits.astype(out_ref.dtype)   # 128-lane store

    return kernel


def pack_params(params, filter_sizes, compute_dtype=jnp.bfloat16):
    """One-time re-layout: fuse filters, fold fc1@fc2, pad lanes to 128."""
    emb = params["embeddings"]                      # (V, E)
    E = emb.shape[1]
    n = len(filter_sizes)
    F = params["conv_w"][0].shape[0]                # num_filters

    pad_l = [(f - 1) // 2 for f in filter_sizes]    # torch: floor((f-1)/2)
    pad_r = [(f - 1) - p for f, p in zip(filter_sizes, pad_l)]
    max_l, max_r = max(pad_l), max(pad_r)
    n_taps = max_l + max_r + 1                      # shared tap window

    Fn = F * n
    Fn_pad = _round_up(Fn, 128)
    H = params["fc1_w"].shape[0]
    C = params["fc2_w"].shape[0]
    H_pad = _round_up(H, 128)
    C_pad = _round_up(C, 128)

    # Stack every filter size into one (n_taps, E, Fn_pad) weight: filter i's
    # taps sit at tap offset (max_l - pad_l[i]) in the shared window and at
    # lanes [i*F, (i+1)*F); everything else is zero.
    w_stack = jnp.zeros((n_taps, E, Fn_pad), jnp.float32)
    b_conv = jnp.zeros((1, Fn_pad), jnp.float32)
    for i, f in enumerate(filter_sizes):
        off = max_l - pad_l[i]
        w_i = jnp.transpose(params["conv_w"][i], (2, 1, 0))     # (f, E, F)
        w_stack = w_stack.at[off:off + f, :, i * F:(i + 1) * F].set(w_i)
        b_conv = b_conv.at[0, i * F:(i + 1) * F].set(params["conv_b"][i])
    w_conv = w_stack.reshape(n_taps * E, Fn_pad).astype(compute_dtype)

    # fc1 -> fc2 fold (dropout is inference-mode identity, no nonlinearity):
    #   logits = ((pooled + b_conv) @ W1 + b1) @ W2 + b2
    #          = pooled @ (W1 @ W2) + (b_conv @ (W1 @ W2) + b1 @ W2 + b2)
    # TODO(synk): if training-mode dropout between fc1/fc2 is ever needed this
    # fold (and the identity-dropout assumption) must be undone.
    w1 = jnp.zeros((Fn_pad, H_pad), jnp.float32).at[:Fn, :H].set(params["fc1_w"].T)
    b1 = jnp.zeros((1, H_pad), jnp.float32).at[0, :H].set(params["fc1_b"])
    w2 = jnp.zeros((H_pad, C_pad), jnp.float32).at[:H, :C].set(params["fc2_w"].T)
    b2 = jnp.zeros((1, C_pad), jnp.float32).at[0, :C].set(params["fc2_b"])
    w12 = w1 @ w2                                   # (Fn_pad, C_pad), f32
    b12 = b_conv @ w12 + b1 @ w2 + b2               # (1, C_pad), f32

    return dict(
        emb=emb.astype(compute_dtype),
        w_conv=w_conv,
        w12=w12.astype(compute_dtype),
        b12=b12,
        meta=dict(n_taps=n_taps, max_l=max_l, Fn_pad=Fn_pad, C_pad=C_pad, C=C),
    )


def _choose_tiles(B, L, E, n_taps, Fn_pad, C_pad, act_bytes, w_bytes, l_tile=None):
    """Pick batch/sequence tiles + VMEM budget.

    TB: >= 2 grid steps whenever the batch allows it so the "parallel" axis can
        shard across both v7x TensorCores (harmless on 1-TC v5e/v6e).
    TL: largest multiple of 8 whose per-step working set (double-buffered
        activation block + f32 conv accumulator + tap/im2col temps) fits a
        conservative budget derived for v7x's 64 MiB physical VMEM.
    """
    TB = 8 if B <= 8 else min(32, _round_up(max(8, (B + 1) // 2), 8))

    def working_set(tl):
        tl_in = tl + n_taps - 1
        return (2 * TB * tl_in * E * act_bytes       # double-buffered x blocks
                + TB * tl * Fn_pad * 4               # f32 conv accumulator
                + TB * tl * n_taps * E * act_bytes)  # im2col / tap-slice temps

    if l_tile is not None:
        TL = max(8, _round_up(min(l_tile, L), 8))
    else:
        TL = max(8, _round_up(min(L, 512), 8))
        while TL > 8 and working_set(TL) > 24 * 2**20:
            TL = max(8, _round_up(TL // 2, 8))

    weights = (n_taps * E * Fn_pad + Fn_pad * C_pad) * w_bytes + C_pad * 4
    est = working_set(TL) + 2 * weights + 2 * TB * C_pad * 4 + TB * Fn_pad * 4
    vmem_limit = int(min(48 * 2**20, max(16 * 2**20, 3 * est // 2)))
    return TB, TL, vmem_limit


def cnn_forward(tokens, packed, padding_idx=0, l_tile=None):
    """Wrapper: windowed embedding gather, then one (batch, L)-gridded kernel."""
    m = packed["meta"]
    emb = packed["emb"]
    B, L = tokens.shape
    E = emb.shape[1]
    n_taps, max_l = m["n_taps"], m["max_l"]
    Fn_pad, C_pad = m["Fn_pad"], m["C_pad"]
    act_bytes = jnp.dtype(emb.dtype).itemsize
    w_bytes = jnp.dtype(packed["w_conv"].dtype).itemsize

    TB, TL, vmem_limit = _choose_tiles(B, L, E, n_taps, Fn_pad, C_pad,
                                       act_bytes, w_bytes, l_tile)
    B_pad = _round_up(B, TB)
    n_lt = pl.cdiv(L, TL)
    L_out_pad = n_lt * TL
    TL_in = TL + n_taps - 1

    # Pad the TOKEN ids (not the activations): left by max_l, right by max_r
    # plus the L-tile round-up, batch rows to a multiple of TB.  Padded
    # positions are forced to exactly zero in the embedded slab (matching
    # F.pad on the activations) via the validity mask, so this does not rely
    # on emb[padding_idx] being zero.
    right_pad = (n_taps - 1 - max_l) + (L_out_pad - L)
    tok_p = jnp.pad(tokens, ((0, B_pad - B), (max_l, right_pad)),
                    constant_values=padding_idx)
    valid = jnp.pad(jnp.ones((B, L), emb.dtype),
                    ((0, B_pad - B), (max_l, right_pad)))
    # Overlapping L windows (halo = n_taps-1 rows) built on the int32 ids, so
    # the embedding gather lands directly in the tiled layout — no second
    # padded activation slab round-trips through HBM.
    win = jnp.arange(n_lt)[:, None] * TL + jnp.arange(TL_in)[None, :]
    x = jnp.take(emb, tok_p[:, win], axis=0) * valid[:, win][..., None]
    # x: (B_pad, n_lt, TL_in, E)

    fuse_taps = (E % 128 == 0)
    kernel = _make_kernel(n_taps, TB, TL, E, Fn_pad, L, fuse_taps)

    # NOTE: the constant-index weight BlockSpecs are still double-buffered by
    # the pipeline; at Fn_pad/C_pad = 128 that is a few hundred KiB, so it is
    # not worth a manual single-DMA load even on v7x's 64 MiB VMEM.
    out = pl.pallas_call(
        kernel,
        out_shape=jax.ShapeDtypeStruct((B_pad, C_pad), jnp.float32),
        grid_spec=pltpu.PrefetchScalarGridSpec(
            num_scalar_prefetch=0,
            grid=(B_pad // TB, n_lt),
            in_specs=[
                pl.BlockSpec((TB, None, TL_in, E), lambda b, l: (b, l, 0, 0)),
                pl.BlockSpec((n_taps * E, Fn_pad), lambda b, l: (0, 0)),
                pl.BlockSpec((Fn_pad, C_pad), lambda b, l: (0, 0)),
                pl.BlockSpec((1, C_pad), lambda b, l: (0, 0)),
            ],
            out_specs=pl.BlockSpec((TB, C_pad), lambda b, l: (b, 0)),
            scratch_shapes=[pltpu.VMEM((TB, Fn_pad), jnp.float32)],
        ),
        compiler_params=pltpu.CompilerParams(
            dimension_semantics=("parallel", "arbitrary"),
            vmem_limit_bytes=vmem_limit),
    )(x, packed["w_conv"], packed["w12"], packed["b12"])
    return out[:B, :m["C"]]                               # strip padding


def cnn_forward_ref(tokens, params, filter_sizes):
    """Pure-JAX reference mirroring the torch forward (NCW conv)."""
    x = jnp.take(params["embeddings"], tokens, axis=0)  # (B, L, E)
    x_ncw = jnp.transpose(x, (0, 2, 1))                 # (B, E, L)
    pooled = []
    for i, f in enumerate(filter_sizes):
        pad_l = (f - 1) // 2
        pad_r = (f - 1) - pad_l
        xp = jnp.pad(x_ncw, ((0, 0), (0, 0), (pad_l, pad_r)))
        o = jax.lax.conv_general_dilated(
            xp, params["conv_w"][i], window_strides=(1,), padding="VALID",
            dimension_numbers=("NCH", "OIH", "NCH"))
        o = o + params["conv_b"][i][None, :, None]
        pooled.append(jnp.max(o, axis=2))
    z = jnp.concatenate(pooled, axis=1)
    h = z @ params["fc1_w"].T + params["fc1_b"]
    return h @ params["fc2_w"].T + params["fc2_b"]


def init_params(key, vocab_size, embedding_dim, num_filters, filter_sizes,
                hidden_dim, num_classes, padding_idx=0):
    n = len(filter_sizes)
    keys = jax.random.split(key, 4 + 2 * n)
    emb = 0.1 * jax.random.normal(keys[0], (vocab_size, embedding_dim), jnp.float32)
    emb = emb.at[padding_idx].set(0.0)   # nn.Embedding zeroes padding_idx row
    conv_w, conv_b = [], []
    for i, f in enumerate(filter_sizes):
        conv_w.append(0.1 * jax.random.normal(
            keys[1 + 2 * i], (num_filters, embedding_dim, f), jnp.float32))
        conv_b.append(0.1 * jax.random.normal(
            keys[2 + 2 * i], (num_filters,), jnp.float32))
    k_off = 1 + 2 * n
    fc1_w = 0.1 * jax.random.normal(
        keys[k_off], (hidden_dim, num_filters * n), jnp.float32)
    fc1_b = 0.05 * jnp.ones((hidden_dim,), jnp.float32)
    fc2_w = 0.1 * jax.random.normal(
        keys[k_off + 1], (num_classes, hidden_dim), jnp.float32)
    fc2_b = 0.05 * jnp.ones((num_classes,), jnp.float32)
    return dict(embeddings=emb, conv_w=conv_w, conv_b=conv_b,
                fc1_w=fc1_w, fc1_b=fc1_b, fc2_w=fc2_w, fc2_b=fc2_b)


if __name__ == "__main__":
    key = jax.random.PRNGKey(0)
    pkey, tkey, pkey2, tkey2 = jax.random.split(key, 4)

    # --- small, module-consistent shapes (exercises the per-tap accumulate
    #     path since E=32 is not lane-aligned) ---
    B, L = 2, 8
    vocab_size, embedding_dim = 50, 32
    num_filters, filter_sizes = 8, (2, 3, 4)
    hidden_dim, num_classes = 16, 4

    params = init_params(pkey, vocab_size, embedding_dim, num_filters,
                         filter_sizes, hidden_dim, num_classes)
    tokens = jax.random.randint(tkey, (B, L), 0, vocab_size, dtype=jnp.int32)
    ref = cnn_forward_ref(tokens, params, filter_sizes)

    # f32 operand path (closest to torch numerics).
    packed_f32 = pack_params(params, filter_sizes, compute_dtype=jnp.float32)
    out_f32 = jax.block_until_ready(cnn_forward(tokens, packed_f32))
    assert out_f32.shape == (B, num_classes)
    assert jnp.allclose(out_f32, ref, atol=1e-3, rtol=1e-3), (out_f32, ref)

    # bf16 operand path (default; f32 accumulation inside).
    packed_bf16 = pack_params(params, filter_sizes)
    out_bf16 = jax.block_until_ready(cnn_forward(tokens, packed_bf16))
    assert out_bf16.shape == (B, num_classes)
    assert jnp.allclose(out_bf16, ref, atol=2e-2, rtol=5e-2), (out_bf16, ref)

    # --- moderate shapes: exercises batch tiling (>=2 parallel steps),
    #     L tiling with running-max + tail masking (200 % 64 != 0), and the
    #     lane-aligned fused-tap im2col path (E=128) ---
    B2, L2 = 20, 200
    vs2, E2, F2, fs2, H2, C2 = 300, 128, 32, (3, 4, 5), 64, 5
    params2 = init_params(pkey2, vs2, E2, F2, fs2, H2, C2)
    tokens2 = jax.random.randint(tkey2, (B2, L2), 0, vs2, dtype=jnp.int32)
    ref2 = cnn_forward_ref(tokens2, params2, fs2)
    packed2 = pack_params(params2, fs2, compute_dtype=jnp.float32)
    out2 = jax.block_until_ready(cnn_forward(tokens2, packed2, l_tile=64))
    assert out2.shape == (B2, C2)
    assert jnp.allclose(out2, ref2, atol=2e-3, rtol=2e-3), (out2, ref2)

    print("KERNEL_OK")
</pallas_src>

<mosaic_0001>
module attributes {stable_mosaic.version = 11 : i64} {
  func.func @kernel(%arg0: i32, %arg1: i32, %arg2: memref<8x1x11x32xf32, #tpu.memory_space<vmem>>, %arg3: memref<128x128xf32, #tpu.memory_space<vmem>>, %arg4: memref<128x128xf32, #tpu.memory_space<vmem>>, %arg5: memref<1x128xf32, #tpu.memory_space<vmem>>, %arg6: memref<8x128xf32, #tpu.memory_space<vmem>>, %arg7: memref<8x128xf32, #tpu.memory_space<vmem>>) attributes {dimension_semantics = [#tpu.dimension_semantics<parallel>, #tpu.dimension_semantics<arbitrary>], iteration_bounds = array<i64: 1, 1>, scalar_prefetch = 0 : i64, scratch_operands = 1 : i64, tpu.core_type = #tpu.core_type<tc>, window_params = [{transform_indices = @transform_0, window_bounds = array<i64: 8, 1, 11, 32>}, {pipeline_mode = #tpu.pipeline_mode<synchronous>, transform_indices = @transform_1, window_bounds = array<i64: 128, 128>}, {pipeline_mode = #tpu.pipeline_mode<synchronous>, transform_indices = @transform_2, window_bounds = array<i64: 128, 128>}, {pipeline_mode = #tpu.pipeline_mode<synchronous>, transform_indices = @transform_3, window_bounds = array<i64: 1, 128>}, {transform_indices = @transform_4, window_bounds = array<i64: 8, 128>}]} {
    %c0 = arith.constant 0 : index
    %c0_0 = arith.constant 0 : index
    %c0_1 = arith.constant 0 : index
    %c0_2 = arith.constant 0 : index
    %0 = vector.load %arg2[%c0, %c0_0, %c0_1, %c0_2] : memref<8x1x11x32xf32, #tpu.memory_space<vmem>>, vector<8x1x11x32xf32>
    %1 = vector.shape_cast %0 : vector<8x1x11x32xf32> to vector<8x11x32xf32>
    %cst = arith.constant 0.000000e+00 : f32
    %2 = vector.broadcast %cst : f32 to vector<64x128xf32>
    %3 = vector.extract_strided_slice %1 {offsets = [0, 0, 0], sizes = [8, 8, 32], strides = [1, 1, 1]} : vector<8x11x32xf32> to vector<8x8x32xf32>
    %4 = vector.shape_cast %3 : vector<8x8x32xf32> to vector<64x32xf32>
    %c0_3 = arith.constant 0 : index
    %c0_4 = arith.constant 0 : index
    %5 = vector.load %arg3[%c0_3, %c0_4] : memref<128x128xf32, #tpu.memory_space<vmem>>, vector<32x128xf32>
    %cst_5 = arith.constant dense<0.000000e+00> : vector<64x128xf32>
    %6 = tpu.matmul %4, %5, %cst_5 {dimension_numbers = #tpu.dot_dimension_numbers<[1], [0], [0], [1], [0, 0, 1, 1], [], []>} : vector<64x32xf32>, vector<32x128xf32>, vector<64x128xf32> -> vector<64x128xf32>
    %7 = arith.addf %2, %6 : vector<64x128xf32>
    %8 = vector.extract_strided_slice %1 {offsets = [0, 1, 0], sizes = [8, 8, 32], strides = [1, 1, 1]} : vector<8x11x32xf32> to vector<8x8x32xf32>
    %9 = vector.shape_cast %8 : vector<8x8x32xf32> to vector<64x32xf32>
    %c32 = arith.constant 32 : index
    %c0_6 = arith.constant 0 : index
    %10 = vector.load %arg3[%c32, %c0_6] : memref<128x128xf32, #tpu.memory_space<vmem>>, vector<32x128xf32>
    %cst_7 = arith.constant dense<0.000000e+00> : vector<64x128xf32>
    %11 = tpu.matmul %9, %10, %cst_7 {dimension_numbers = #tpu.dot_dimension_numbers<[1], [0], [0], [1], [0, 0, 1, 1], [], []>} : vector<64x32xf32>, vector<32x128xf32>, vector<64x128xf32> -> vector<64x128xf32>
    %12 = arith.addf %7, %11 : vector<64x128xf32>
    %13 = vector.extract_strided_slice %1 {offsets = [0, 2, 0], sizes = [8, 8, 32], strides = [1, 1, 1]} : vector<8x11x32xf32> to vector<8x8x32xf32>
    %14 = vector.shape_cast %13 : vector<8x8x32xf32> to vector<64x32xf32>
    %c64 = arith.constant 64 : index
    %c0_8 = arith.constant 0 : index
    %15 = vector.load %arg3[%c64, %c0_8] : memref<128x128xf32, #tpu.memory_space<vmem>>, vector<32x128xf32>
    %cst_9 = arith.constant dense<0.000000e+00> : vector<64x128xf32>
    %16 = tpu.matmul %14, %15, %cst_9 {dimension_numbers = #tpu.dot_dimension_numbers<[1], [0], [0], [1], [0, 0, 1, 1], [], []>} : vector<64x32xf32>, vector<32x128xf32>, vector<64x128xf32> -> vector<64x128xf32>
    %17 = arith.addf %12, %16 : vector<64x128xf32>
    %18 = vector.extract_strided_slice %1 {offsets = [0, 3, 0], sizes = [8, 8, 32], strides = [1, 1, 1]} : vector<8x11x32xf32> to vector<8x8x32xf32>
    %19 = vector.shape_cast %18 : vector<8x8x32xf32> to vector<64x32xf32>
    %c96 = arith.constant 96 : index
    %c0_10 = arith.constant 0 : index
    %20 = vector.load %arg3[%c96, %c0_10] : memref<128x128xf32, #tpu.memory_space<vmem>>, vector<32x128xf32>
    %cst_11 = arith.constant dense<0.000000e+00> : vector<64x128xf32>
    %21 = tpu.matmul %19, %20, %cst_11 {dimension_numbers = #tpu.dot_dimension_numbers<[1], [0], [0], [1], [0, 0, 1, 1], [], []>} : vector<64x32xf32>, vector<32x128xf32>, vector<64x128xf32> -> vector<64x128xf32>
    %22 = arith.addf %17, %21 : vector<64x128xf32>
    %23 = vector.shape_cast %22 : vector<64x128xf32> to vector<8x8x128xf32>
    %cst_12 = arith.constant dense<0xFF800000> : vector<8x128xf32>
    %24 = vector.multi_reduction <maximumf>, %23, %cst_12 [1] : vector<8x8x128xf32> to vector<8x128xf32>
    %c0_i32 = arith.constant 0 : i32
    %25 = arith.cmpi eq, %arg1, %c0_i32 : i32
    %26 = arith.extui %25 : i1 to i32
    %c0_i32_13 = arith.constant 0 : i32
    %27 = arith.cmpi ne, %26, %c0_i32_13 : i32
    scf.if %27 {
      %c0_18 = arith.constant 0 : index
      %c0_19 = arith.constant 0 : index
      %34 = vector.load %arg7[%c0_18, %c0_19] : memref<8x128xf32, #tpu.memory_space<vmem>>, vector<8x128xf32>
      tpu.vector_store %arg7[%c0_18, %c0_19], %24 {strides = array<i32>} : memref<8x128xf32, #tpu.memory_space<vmem>>, vector<8x128xf32>,
    } else {
    }
    %c0_i32_14 = arith.constant 0 : i32
    %28 = arith.cmpi sgt, %arg1, %c0_i32_14 : i32
    %29 = arith.extui %28 : i1 to i32
    %c0_i32_15 = arith.constant 0 : i32
    %30 = arith.cmpi ne, %29, %c0_i32_15 : i32
    scf.if %30 {
      %c0_18 = arith.constant 0 : index
      %c0_19 = arith.constant 0 : index
      %34 = vector.load %arg7[%c0_18, %c0_19] : memref<8x128xf32, #tpu.memory_space<vmem>>, vector<8x128xf32>
      %35 = arith.maximumf %34, %24 : vector<8x128xf32>
      %c0_20 = arith.constant 0 : index
      %c0_21 = arith.constant 0 : index
      %36 = vector.load %arg7[%c0_20, %c0_21] : memref<8x128xf32, #tpu.memory_space<vmem>>, vector<8x128xf32>
      tpu.vector_store %arg7[%c0_20, %c0_21], %35 {strides = array<i32>} : memref<8x128xf32, #tpu.memory_space<vmem>>, vector<8x128xf32>,
    } else {
    }
    %c0_i32_16 = arith.constant 0 : i32
    %31 = arith.cmpi eq, %arg1, %c0_i32_16 : i32
    %32 = arith.extui %31 : i1 to i32
    %c0_i32_17 = arith.constant 0 : i32
    %33 = arith.cmpi ne, %32, %c0_i32_17 : i32
    scf.if %33 {
      %c0_18 = arith.constant 0 : index
      %c0_19 = arith.constant 0 : index
      %34 = vector.load %arg7[%c0_18, %c0_19] : memref<8x128xf32, #tpu.memory_space<vmem>>, vector<8x128xf32>
      %c0_20 = arith.constant 0 : index
      %c0_21 = arith.constant 0 : index
      %35 = vector.load %arg4[%c0_20, %c0_21] : memref<128x128xf32, #tpu.memory_space<vmem>>, vector<128x128xf32>
      %cst_22 = arith.constant dense<0.000000e+00> : vector<8x128xf32>
      %36 = tpu.matmul %34, %35, %cst_22 {dimension_numbers = #tpu.dot_dimension_numbers<[1], [0], [0], [1], [0, 0, 1, 1], [], []>} : vector<8x128xf32>, vector<128x128xf32>, vector<8x128xf32> -> vector<8x128xf32>
      %c0_23 = arith.constant 0 : index
      %c0_24 = arith.constant 0 : index
      %37 = vector.load %arg5[%c0_23, %c0_24] : memref<1x128xf32, #tpu.memory_space<vmem>>, vector<1x128xf32>
      %38 = vector.broadcast %37 : vector<1x128xf32> to vector<8x128xf32>
      %39 = arith.addf %36, %38 : vector<8x128xf32>
      %c0_25 = arith.constant 0 : index
      %c0_26 = arith.constant 0 : index
      %40 = vector.load %arg6[%c0_25, %c0_26] : memref<8x128xf32, #tpu.memory_space<vmem>>, vector<8x128xf32>
      tpu.vector_store %arg6[%c0_25, %c0_26], %39 {strides = array<i32>} : memref<8x128xf32, #tpu.memory_space<vmem>>, vector<8x128xf32>,
    } else {
    }
    return
  }
  func.func @transform_0(%arg0: i32, %arg1: i32) -> (i32, i32, i32, i32) {
    %c0_i32 = arith.constant 0 : i32
    %c0_i32_0 = arith.constant 0 : i32
    %c0_i32_1 = arith.constant 0 : i32
    return %arg0, %arg1, %c0_i32, %c0_i32_0 : i32, i32, i32, i32
  }
  func.func @transform_1(%arg0: i32, %arg1: i32) -> (i32, i32) {
    %c0_i32 = arith.constant 0 : i32
    %c0_i32_0 = arith.constant 0 : i32
    %c0_i32_1 = arith.constant 0 : i32
    return %c0_i32, %c0_i32_0 : i32, i32
  }
  func.func @transform_2(%arg0: i32, %arg1: i32) -> (i32, i32) {
    %c0_i32 = arith.constant 0 : i32
    %c0_i32_0 = arith.constant 0 : i32
    %c0_i32_1 = arith.constant 0 : i32
    return %c0_i32, %c0_i32_0 : i32, i32
  }
  func.func @transform_3(%arg0: i32, %arg1: i32) -> (i32, i32) {
    %c0_i32 = arith.constant 0 : i32
    %c0_i32_0 = arith.constant 0 : i32
    %c0_i32_1 = arith.constant 0 : i32
    return %c0_i32, %c0_i32_0 : i32, i32
  }
  func.func @transform_4(%arg0: i32, %arg1: i32) -> (i32, i32) {
    %c0_i32 = arith.constant 0 : i32
    %c0_i32_0 = arith.constant 0 : i32
    return %arg0, %c0_i32 : i32, i32
  }
}

</mosaic_0001>

<llo_original>
// kernel: tpu_custom_call.1
$region0: #{tpu_custom_call.1}
  #allocation0 [shape = 'u32[]', space=smem, size = 0x4, offset = 0x4, fixed_abs, tag = 'smem constant byte address 0x4 - core index']
  #allocation1 [shape = 'u32[72,128]{1,0:T(1,128)}', space=vmem, size = 0x9000, scoped, tag = 'internal scratch']
  #allocation2 [shape = 'f32[8,128]{1,0:T(8,128)}', space=vmem, size = 0x1000, scoped, tag = 'scratch operand']
  %s0 = inlined_call_operand.vmem [shape: f32[8,1,11,32], index: 0, kind: input, shape index: {}]
  %s1 = inlined_call_operand.vmem [shape: f32[128,128], index: 1, kind: input, shape index: {}]
  %s2 = inlined_call_operand.hbm [shape: f32[128,128], index: 2, kind: input, shape index: {}]
  %s3 = inlined_call_operand.vmem [shape: f32[1,128], index: 3, kind: input, shape index: {}]
  %s4 = inlined_call_operand.hbm [shape: f32[8,128], index: 4, kind: output, shape index: {}]
  %s5 = sld [smem:[#allocation0]]
  $region42: #{tpu_custom_call.1} parent=0
    _
  %s7 = ssub.s32 1, %s5
  %s8 = scalar_select 0, %s7, %s5
  $region1: #{tpu_custom_call.1} parent=0
    #allocation3 [shape = 'u8[65536]{0}', space=vmem, size = 0x10000, scoped, tag = 'input window, operand 2, single buffered']
    #allocation4 [shape = 's32[1]{0}', space=sflag, size = 0x4, scoped, tag = 'scoped memory for tpu_custom_call.1']
    #allocation5 [shape = 's32[1]{0}', space=sflag, size = 0x4, scoped, tag = 'scoped memory for tpu_custom_call.1']
    #allocation6 [shape = 'u8[4096]{0}', space=vmem, size = 0x1000, scoped, tag = 'output window, operand 0, single buffered']
    %9 = vsyncpa [#allocation4], 0
    %10 = vsyncpa [#allocation5], 0
    // Predicated region
    $region2: #{tpu_custom_call.1} parent=1 // pred_check
      _
    $region3: #{tpu_custom_call.1} parent=1 // pred_check_branch
      %12 = sbr.rel (0) target = $region5
    $region4: #{tpu_custom_call.1} parent=1 // pred_region
      _
    $region5: #{tpu_custom_call.1} parent=1 // pred_fallthru
      _
    // Predicated region
    $region6: #{tpu_custom_call.1} parent=1 // pred_check
      _
    $region7: #{tpu_custom_call.1} parent=1 // pred_check_branch
      %14 = sbr.rel (0) target = $region9
    $region8: #{tpu_custom_call.1} parent=1 // pred_region
      _
    $region9: #{tpu_custom_call.1} parent=1 // pred_fallthru
      _
    // Predicated region
    $region10: #{tpu_custom_call.1} parent=1 // pred_check
      _
    $region11: #{tpu_custom_call.1} parent=1 // pred_check_branch
      %16 = sbr.rel (0) target = $region13
    $region12: #{tpu_custom_call.1} parent=1 // pred_region
      %18 = vsyncadd [#allocation4], 0
      %s19 = sshll.u32 %s2, 4
      %s20 = int_to_ptr.hbm [resolvable:$true] %s19
      %s21 = sshll.u32 [#allocation3], 4
      %s22 = int_to_ptr.vmem [resolvable:$true] %s21
      %27 = dma.hbm_to_vmem [thread:$0]  %s20, 2048, %s22, [#allocation4], 128, 128, 8
    $region13: #{tpu_custom_call.1} parent=1 // pred_fallthru
      _
    // Predicated region
    $region14: #{tpu_custom_call.1} parent=1 // pred_check
      _
    $region15: #{tpu_custom_call.1} parent=1 // pred_check_branch
      %29 = sbr.rel (0) target = $region17
    $region16: #{tpu_custom_call.1} parent=1 // pred_region
      _
    $region17: #{tpu_custom_call.1} parent=1 // pred_fallthru
      _
    // Predicated region
    $region18: #{tpu_custom_call.1} parent=1 // pred_check
      _
    $region19: #{tpu_custom_call.1} parent=1 // pred_check_branch
      %31 = sbr.rel (0) target = $region21
    $region20: #{tpu_custom_call.1} parent=1 // pred_region
      %33 = dma.done [#allocation4], 2048
    $region21: #{tpu_custom_call.1} parent=1 // pred_fallthru
      _
    %v34 = vld [vmem:[%s0] sm:$0xff]
    %v35 = vld [vmem:[%s0 + $0x8] sm:$0x7]
    %v36 = vld [vmem:[%s0 + $0x10] sm:$0xff]
    %v37 = vld [vmem:[%s0 + $0x18] sm:$0x7]
    %v38 = vld [vmem:[%s0 + $0x20] sm:$0xff]
    %v39 = vld [vmem:[%s0 + $0x28] sm:$0x7]
    %v40 = vld [vmem:[%s0 + $0x30] sm:$0xff]
    %v41 = vld [vmem:[%s0 + $0x38] sm:$0x7]
    %v42 = vld [vmem:[%s0 + $0x40] sm:$0xff]
    %v43 = vld [vmem:[%s0 + $0x48] sm:$0x7]
    %v44 = vld [vmem:[%s0 + $0x50] sm:$0xff]
    %v45 = vld [vmem:[%s0 + $0x58] sm:$0x7]
    %v46 = vld [vmem:[%s0 + $0x60] sm:$0xff]
    %v47 = vld [vmem:[%s0 + $0x68] sm:$0x7]
    %v48 = vld [vmem:[%s0 + $0x70] sm:$0xff]
    %v49 = vld [vmem:[%s0 + $0x78] sm:$0x7]
    %v50 = vld [vmem:[%s1] sm:$0xff]
    %v51 = vld [vmem:[%s1 + $0x8] sm:$0xff]
    %v52 = vld [vmem:[%s1 + $0x10] sm:$0xff]
    %v53 = vld [vmem:[%s1 + $0x18] sm:$0xff]
    %vm70 = vcmask 1046528
    %v71 = vrot.slane %v34, 1
    %v72 = vrot.slane %v35, 1
    %v73 = vsel %vm70, %v71, %v72
    %v74 = vrot.slane %v36, 1
    %v75 = vrot.slane %v37, 1
    %v76 = vsel %vm70, %v74, %v75
    %v77 = vrot.slane %v38, 1
    %v78 = vrot.slane %v39, 1
    %v79 = vsel %vm70, %v77, %v78
    %v80 = vrot.slane %v40, 1
    %v81 = vrot.slane %v41, 1
    %v82 = vsel %vm70, %v80, %v81
    %v83 = vrot.slane %v42, 1
    %v84 = vrot.slane %v43, 1
    %v85 = vsel %vm70, %v83, %v84
    %v86 = vrot.slane %v44, 1
    %v87 = vrot.slane %v45, 1
    %v88 = vsel %vm70, %v86, %v87
    %v89 = vrot.slane %v46, 1
    %v90 = vrot.slane %v47, 1
    %v91 = vsel %vm70, %v89, %v90
    %v92 = vrot.slane %v48, 1
    %v93 = vrot.slane %v49, 1
    %v94 = vsel %vm70, %v92, %v93
    %v95 = vld [vmem:[%s1 + $0x20] sm:$0xff]
    %v96 = vld [vmem:[%s1 + $0x28] sm:$0xff]
    %v97 = vld [vmem:[%s1 + $0x30] sm:$0xff]
    %v98 = vld [vmem:[%s1 + $0x38] sm:$0xff]
    %vm99 = vcmask 261120
    %v100 = vsel %vm99, %v73, 0
    %v102 = vsel %vm99, %v76, 0
    %v104 = vsel %vm99, %v79, 0
    %v106 = vsel %vm99, %v82, 0
    %v108 = vsel %vm99, %v85, 0
    %v110 = vsel %vm99, %v88, 0
    %v112 = vsel %vm99, %v91, 0
    %v114 = vsel %vm99, %v94, 0
    %116 = vmatpush.msra.mxu0 0.0
    %117 = vmatpush.msra.mxu0 0.0
    %118 = vmatpush.msra.mxu0 0.0
    %119 = vmatpush.msra.mxu0 0.0
    %120 = vmatpush.msra.mxu0 0.0
    %121 = vmatpush.msra.mxu0 0.0
    %122 = vmatpush.msra.mxu0 0.0
    %123 = vmatpush.msra.mxu0 0.0
    %124 = vmatpush.msra.mxu0 0.0
    %125 = vmatpush.msra.mxu0 0.0
    %126 = vmatpush.msra.mxu0 0.0
    %127 = vmatpush.msra.mxu0 0.0
    %128 = vmatpush.msra.mxu0 %v98
    %129 = vmatpush.msra.mxu0 %v97
    %130 = vmatpush.msra.mxu0 %v96
    %131 = vmatpush.msra.mxu0 %v95
    %132 = vmatmul.f32.gmra.mxu0 %v100
    %v133 = vpop.f32.mrf.mxu0
    %v134 = vadd.f32 0.0, %v133
    %135 = vmatmul.f32.gmra.mxu0 %v102
    %v136 = vpop.f32.mrf.mxu0
    %v137 = vadd.f32 0.0, %v136
    %138 = vmatmul.f32.gmra.mxu0 %v104
    %v139 = vpop.f32.mrf.mxu0
    %v140 = vadd.f32 0.0, %v139
    %141 = vmatmul.f32.gmra.mxu0 %v106
    %v142 = vpop.f32.mrf.mxu0
    %v143 = vadd.f32 0.0, %v142
    %144 = vmatmul.f32.gmra.mxu0 %v108
    %v145 = vpop.f32.mrf.mxu0
    %v146 = vadd.f32 0.0, %v145
    %147 = vmatmul.f32.gmra.mxu0 %v110
    %v148 = vpop.f32.mrf.mxu0
    %v149 = vadd.f32 0.0, %v148
    %150 = vmatmul.f32.gmra.mxu0 %v112
    %v151 = vpop.f32.mrf.mxu0
    %v152 = vadd.f32 0.0, %v151
    %153 = vmatmul.f32.gmra.mxu0 %v114
    %v154 = vpop.f32.mrf.mxu0
    %v155 = vadd.f32 0.0, %v154
    %156 = vdwg.mxu0
    %v157 = vsel %vm99, %v34, 0
    %v159 = vsel %vm99, %v36, 0
    %v161 = vsel %vm99, %v38, 0
    %v163 = vsel %vm99, %v40, 0
    %v165 = vsel %vm99, %v42, 0
    %v167 = vsel %vm99, %v44, 0
    %v169 = vsel %vm99, %v46, 0
    %v171 = vsel %vm99, %v48, 0
    %173 = vmatpush.msra.mxu0 0.0
    %174 = vmatpush.msra.mxu0 0.0
    %175 = vmatpush.msra.mxu0 0.0
    %176 = vmatpush.msra.mxu0 0.0
    %177 = vmatpush.msra.mxu0 0.0
    %178 = vmatpush.msra.mxu0 0.0
    %179 = vmatpush.msra.mxu0 0.0
    %180 = vmatpush.msra.mxu0 0.0
    %181 = vmatpush.msra.mxu0 0.0
    %182 = vmatpush.msra.mxu0 0.0
    %183 = vmatpush.msra.mxu0 0.0
    %184 = vmatpush.msra.mxu0 0.0
    %185 = vmatpush.msra.mxu0 %v53
    %186 = vmatpush.msra.mxu0 %v52
    %187 = vmatpush.msra.mxu0 %v51
    %188 = vmatpush.msra.mxu0 %v50
    %189 = vmatmul.f32.gmra.mxu0 %v157
    %v190 = vpop.f32.mrf.mxu0
    %v191 = vadd.f32 %v134, %v190
    %192 = vmatmul.f32.gmra.mxu0 %v159
    %v193 = vpop.f32.mrf.mxu0
    %v194 = vadd.f32 %v137, %v193
    %195 = vmatmul.f32.gmra.mxu0 %v161
    %v196 = vpop.f32.mrf.mxu0
    %v197 = vadd.f32 %v140, %v196
    %198 = vmatmul.f32.gmra.mxu0 %v163
    %v199 = vpop.f32.mrf.mxu0
    %v200 = vadd.f32 %v143, %v199
    %201 = vmatmul.f32.gmra.mxu0 %v165
    %v202 = vpop.f32.mrf.mxu0
    %v203 = vadd.f32 %v146, %v202
    %204 = vmatmul.f32.gmra.mxu0 %v167
    %v205 = vpop.f32.mrf.mxu0
    %v206 = vadd.f32 %v149, %v205
    %207 = vmatmul.f32.gmra.mxu0 %v169
    %v208 = vpop.f32.mrf.mxu0
    %v209 = vadd.f32 %v152, %v208
    %210 = vmatmul.f32.gmra.mxu0 %v171
    %v211 = vpop.f32.mrf.mxu0
    %v212 = vadd.f32 %v155, %v211
    %213 = vdwg.mxu0
    %vm214 = vcmask 1045504
    %v215 = vrot.slane %v34, 2
    %v216 = vrot.slane %v35, 2
    %v217 = vsel %vm214, %v215, %v216
    %v218 = vrot.slane %v36, 2
    %v219 = vrot.slane %v37, 2
    %v220 = vsel %vm214, %v218, %v219
    %v221 = vrot.slane %v38, 2
    %v222 = vrot.slane %v39, 2
    %v223 = vsel %vm214, %v221, %v222
    %v224 = vrot.slane %v40, 2
    %v225 = vrot.slane %v41, 2
    %v226 = vsel %vm214, %v224, %v225
    %v227 = vrot.slane %v42, 2
    %v228 = vrot.slane %v43, 2
    %v229 = vsel %vm214, %v227, %v228
    %v230 = vrot.slane %v44, 2
    %v231 = vrot.slane %v45, 2
    %v232 = vsel %vm214, %v230, %v231
    %v233 = vrot.slane %v46, 2
    %v234 = vrot.slane %v47, 2
    %v235 = vsel %vm214, %v233, %v234
    %v236 = vrot.slane %v48, 2
    %v237 = vrot.slane %v49, 2
    %v238 = vsel %vm214, %v236, %v237
    %v239 = vld [vmem:[%s1 + $0x40] sm:$0xff]
    %v240 = vld [vmem:[%s1 + $0x48] sm:$0xff]
    %v241 = vld [vmem:[%s1 + $0x50] sm:$0xff]
    %v242 = vld [vmem:[%s1 + $0x58] sm:$0xff]
    %v243 = vsel %vm99, %v217, 0
    %v245 = vsel %vm99, %v220, 0
    %v247 = vsel %vm99, %v223, 0
    %v249 = vsel %vm99, %v226, 0
    %v251 = vsel %vm99, %v229, 0
    %v253 = vsel %vm99, %v232, 0
    %v255 = vsel %vm99, %v235, 0
    %v257 = vsel %vm99, %v238, 0
    %259 = vmatpush.msra.mxu0 0.0
    %260 = vmatpush.msra.mxu0 0.0
    %261 = vmatpush.msra.mxu0 0.0
    %262 = vmatpush.msra.mxu0 0.0
    %263 = vmatpush.msra.mxu0 0.0
    %264 = vmatpush.msra.mxu0 0.0
    %265 = vmatpush.msra.mxu0 0.0
    %266 = vmatpush.msra.mxu0 0.0
    %267 = vmatpush.msra.mxu0 0.0
    %268 = vmatpush.msra.mxu0 0.0
    %269 = vmatpush.msra.mxu0 0.0
    %270 = vmatpush.msra.mxu0 0.0
    %271 = vmatpush.msra.mxu0 %v242
    %272 = vmatpush.msra.mxu0 %v241
    %273 = vmatpush.msra.mxu0 %v240
    %274 = vmatpush.msra.mxu0 %v239
    %275 = vmatmul.f32.gmra.mxu0 %v243
    %v276 = vpop.f32.mrf.mxu0
    %v277 = vadd.f32 0.0, %v276
    %278 = vmatmul.f32.gmra.mxu0 %v245
    %v279 = vpop.f32.mrf.mxu0
    %v280 = vadd.f32 0.0, %v279
    %281 = vmatmul.f32.gmra.mxu0 %v247
    %v282 = vpop.f32.mrf.mxu0
    %v283 = vadd.f32 0.0, %v282
    %284 = vmatmul.f32.gmra.mxu0 %v249
    %v285 = vpop.f32.mrf.mxu0
    %v286 = vadd.f32 0.0, %v285
    %287 = vmatmul.f32.gmra.mxu0 %v251
    %v288 = vpop.f32.mrf.mxu0
    %v289 = vadd.f32 0.0, %v288
    %290 = vmatmul.f32.gmra.mxu0 %v253
    %v291 = vpop.f32.mrf.mxu0
    %v292 = vadd.f32 0.0, %v291
    %293 = vmatmul.f32.gmra.mxu0 %v255
    %v294 = vpop.f32.mrf.mxu0
    %v295 = vadd.f32 0.0, %v294
    %296 = vmatmul.f32.gmra.mxu0 %v257
    %v297 = vpop.f32.mrf.mxu0
    %v298 = vadd.f32 0.0, %v297
    %299 = vdwg.mxu0
    %v300 = vadd.f32 %v191, %v277
    %v301 = vadd.f32 %v194, %v280
    %v302 = vadd.f32 %v197, %v283
    %v303 = vadd.f32 %v200, %v286
    %v304 = vadd.f32 %v203, %v289
    %v305 = vadd.f32 %v206, %v292
    %v306 = vadd.f32 %v209, %v295
    %v307 = vadd.f32 %v212, %v298
    %vm308 = vcmask 1044480
    %v309 = vrot.slane %v34, 3
    %v310 = vrot.slane %v35, 3
    %v311 = vsel %vm308, %v309, %v310
    %v312 = vrot.slane %v36, 3
    %v313 = vrot.slane %v37, 3
    %v314 = vsel %vm308, %v312, %v313
    %v315 = vrot.slane %v38, 3
    %v316 = vrot.slane %v39, 3
    %v317 = vsel %vm308, %v315, %v316
    %v318 = vrot.slane %v40, 3
    %v319 = vrot.slane %v41, 3
    %v320 = vsel %vm308, %v318, %v319
    %v321 = vrot.slane %v42, 3
    %v322 = vrot.slane %v43, 3
    %v323 = vsel %vm308, %v321, %v322
    %v324 = vrot.slane %v44, 3
    %v325 = vrot.slane %v45, 3
    %v326 = vsel %vm308, %v324, %v325
    %v327 = vrot.slane %v46, 3
    %v328 = vrot.slane %v47, 3
    %v329 = vsel %vm308, %v327, %v328
    %v330 = vrot.slane %v48, 3
    %v331 = vrot.slane %v49, 3
    %v332 = vsel %vm308, %v330, %v331
    %v333 = vld [vmem:[%s1 + $0x60] sm:$0xff]
    %v334 = vld [vmem:[%s1 + $0x68] sm:$0xff]
    %v335 = vld [vmem:[%s1 + $0x70] sm:$0xff]
    %v336 = vld [vmem:[%s1 + $0x78] sm:$0xff]
    %v337 = vsel %vm99, %v311, 0
    %v339 = vsel %vm99, %v314, 0
    %v341 = vsel %vm99, %v317, 0
    %v343 = vsel %vm99, %v320, 0
    %v345 = vsel %vm99, %v323, 0
    %v347 = vsel %vm99, %v326, 0
    %v349 = vsel %vm99, %v329, 0
    %v351 = vsel %vm99, %v332, 0
    %353 = vmatpush.msra.mxu0 0.0
    %354 = vmatpush.msra.mxu0 0.0
    %355 = vmatpush.msra.mxu0 0.0
    %356 = vmatpush.msra.mxu0 0.0
    %357 = vmatpush.msra.mxu0 0.0
    %358 = vmatpush.msra.mxu0 0.0
    %359 = vmatpush.msra.mxu0 0.0
    %360 = vmatpush.msra.mxu0 0.0
    %361 = vmatpush.msra.mxu0 0.0
    %362 = vmatpush.msra.mxu0 0.0
    %363 = vmatpush.msra.mxu0 0.0
    %364 = vmatpush.msra.mxu0 0.0
    %365 = vmatpush.msra.mxu0 %v336
    %366 = vmatpush.msra.mxu0 %v335
    %367 = vmatpush.msra.mxu0 %v334
    %368 = vmatpush.msra.mxu0 %v333
    %369 = vmatmul.f32.gmra.mxu0 %v337
    %v370 = vpop.f32.mrf.mxu0
    %v371 = vadd.f32 0.0, %v370
    %372 = vmatmul.f32.gmra.mxu0 %v339
    %v373 = vpop.f32.mrf.mxu0
    %v374 = vadd.f32 0.0, %v373
    %375 = vmatmul.f32.gmra.mxu0 %v341
    %v376 = vpop.f32.mrf.mxu0
    %v377 = vadd.f32 0.0, %v376
    %378 = vmatmul.f32.gmra.mxu0 %v343
    %v379 = vpop.f32.mrf.mxu0
    %v380 = vadd.f32 0.0, %v379
    %381 = vmatmul.f32.gmra.mxu0 %v345
    %v382 = vpop.f32.mrf.mxu0
    %v383 = vadd.f32 0.0, %v382
    %384 = vmatmul.f32.gmra.mxu0 %v347
    %v385 = vpop.f32.mrf.mxu0
    %v386 = vadd.f32 0.0, %v385
    %387 = vmatmul.f32.gmra.mxu0 %v349
    %v388 = vpop.f32.mrf.mxu0
    %v389 = vadd.f32 0.0, %v388
    %390 = vmatmul.f32.gmra.mxu0 %v351
    %v391 = vpop.f32.mrf.mxu0
    %v392 = vadd.f32 0.0, %v391
    %393 = vdwg.mxu0
    %v394 = vadd.f32 %v300, %v371
    %v395 = vadd.f32 %v301, %v374
    %v396 = vadd.f32 %v302, %v377
    %v397 = vadd.f32 %v303, %v380
    %v398 = vadd.f32 %v304, %v383
    %v399 = vadd.f32 %v305, %v386
    %v400 = vadd.f32 %v306, %v389
    %v401 = vadd.f32 %v307, %v392
    %v402 = vrot.slane %v394, 4
    %v403 = vmax.f32 %v394, %v402
    %v404 = vrot.slane %v403, 2
    %v405 = vmax.f32 %v403, %v404
    %v406 = vrot.slane %v405, 1
    %v407 = vmax.f32 %v405, %v406
    %v408 = vrot.slane %v395, 4
    %v409 = vmax.f32 %v395, %v408
    %v410 = vrot.slane %v409, 2
    %v411 = vmax.f32 %v409, %v410
    %v412 = vrot.slane %v411, 1
    %v413 = vmax.f32 %v411, %v412
    %v414 = vrot.slane %v396, 4
    %v415 = vmax.f32 %v396, %v414
    %v416 = vrot.slane %v415, 2
    %v417 = vmax.f32 %v415, %v416
    %v418 = vrot.slane %v417, 1
    %v419 = vmax.f32 %v417, %v418
    %v420 = vrot.slane %v397, 4
    %v421 = vmax.f32 %v397, %v420
    %v422 = vrot.slane %v421, 2
    %v423 = vmax.f32 %v421, %v422
    %v424 = vrot.slane %v423, 1
    %v425 = vmax.f32 %v423, %v424
    %v426 = vrot.slane %v398, 4
    %v427 = vmax.f32 %v398, %v426
    %v428 = vrot.slane %v427, 2
    %v429 = vmax.f32 %v427, %v428
    %v430 = vrot.slane %v429, 1
    %v431 = vmax.f32 %v429, %v430
    %v432 = vrot.slane %v399, 4
    %v433 = vmax.f32 %v399, %v432
    %v434 = vrot.slane %v433, 2
    %v435 = vmax.f32 %v433, %v434
    %v436 = vrot.slane %v435, 1
    %v437 = vmax.f32 %v435, %v436
    %v438 = vrot.slane %v400, 4
    %v439 = vmax.f32 %v400, %v438
    %v440 = vrot.slane %v439, 2
    %v441 = vmax.f32 %v439, %v440
    %v442 = vrot.slane %v441, 1
    %v443 = vmax.f32 %v441, %v442
    %v444 = vrot.slane %v401, 4
    %v445 = vmax.f32 %v401, %v444
    %v446 = vrot.slane %v445, 2
    %v447 = vmax.f32 %v445, %v446
    %v448 = vrot.slane %v447, 1
    %v449 = vmax.f32 %v447, %v448
    %p450 = scmp.eq.s32.totalorder 0, 0
    // Predicated region
    $region22: #{tpu_custom_call.1} parent=1 // pred_check
      %p451 = pneg %p450
    $region23: #{tpu_custom_call.1} parent=1 // pred_check_branch
      %453 = sbr.rel (%p451) target = $region25
    $region24: #{tpu_custom_call.1} parent=1 // pred_region
      %vm462 = vcmask 1041409
      %v463 = vsel %vm462, %v413, %v407
      %vm464 = vcmask 1042434
      %v465 = vsel %vm464, %v419, %v463
      %vm466 = vcmask 1043459
      %v467 = vsel %vm466, %v425, %v465
      %vm468 = vcmask 1044484
      %v469 = vsel %vm468, %v431, %v467
      %vm470 = vcmask 1045509
      %v471 = vsel %vm470, %v437, %v469
      %vm472 = vcmask 1046534
      %v473 = vsel %vm472, %v443, %v471
      %vm474 = vcmask 1047559
      %v475 = vsel %vm474, %v449, %v473
      %477 = vst [vmem:[#allocation2] sm:$0xff] %v475
    $region25: #{tpu_custom_call.1} parent=1 // pred_fallthru
      _
    %p478 = scmp.gt.s32.totalorder 0, 0
    // Predicated region
    $region26: #{tpu_custom_call.1} parent=1 // pred_check
      %p479 = pneg %p478
    $region27: #{tpu_custom_call.1} parent=1 // pred_check_branch
      %481 = sbr.rel (%p479) target = $region29
    $region28: #{tpu_custom_call.1} parent=1 // pred_region
      %v482 = vld [vmem:[#allocation2] sm:$0xff]
      %vm491 = vcmask 1041409
      %v492 = vsel %vm491, %v413, %v407
      %vm493 = vcmask 1042434
      %v494 = vsel %vm493, %v419, %v492
      %vm495 = vcmask 1043459
      %v496 = vsel %vm495, %v425, %v494
      %vm497 = vcmask 1044484
      %v498 = vsel %vm497, %v431, %v496
      %vm499 = vcmask 1045509
      %v500 = vsel %vm499, %v437, %v498
      %vm501 = vcmask 1046534
      %v502 = vsel %vm501, %v443, %v500
      %vm503 = vcmask 1047559
      %v504 = vsel %vm503, %v449, %v502
      %v506 = vmax.f32 %v482, %v504
      %507 = vst [vmem:[#allocation2] sm:$0xff] %v506
    $region29: #{tpu_custom_call.1} parent=1 // pred_fallthru
      _
    // Predicated region
    $region30: #{tpu_custom_call.1} parent=1 // pred_check
      %p508 = pneg %p450
    $region31: #{tpu_custom_call.1} parent=1 // pred_check_branch
      %510 = sbr.rel (%p508) target = $region33
    $region32: #{tpu_custom_call.1} parent=1 // pred_region
      %v511 = vld [vmem:[#allocation2] sm:$0xff]
      %v512 = vld [vmem:[#allocation3] sm:$0xff]
      %v513 = vld [vmem:[#allocation3 + $0x8] sm:$0xff]
      %v514 = vld [vmem:[#allocation3 + $0x10] sm:$0xff]
      %v515 = vld [vmem:[#allocation3 + $0x18] sm:$0xff]
      %v516 = vld [vmem:[#allocation3 + $0x20] sm:$0xff]
      %v517 = vld [vmem:[#allocation3 + $0x28] sm:$0xff]
      %v518 = vld [vmem:[#allocation3 + $0x30] sm:$0xff]
      %v519 = vld [vmem:[#allocation3 + $0x38] sm:$0xff]
      %v520 = vld [vmem:[#allocation3 + $0x40] sm:$0xff]
      %v521 = vld [vmem:[#allocation3 + $0x48] sm:$0xff]
      %v522 = vld [vmem:[#allocation3 + $0x50] sm:$0xff]
      %v523 = vld [vmem:[#allocation3 + $0x58] sm:$0xff]
      %v524 = vld [vmem:[#allocation3 + $0x60] sm:$0xff]
      %v525 = vld [vmem:[#allocation3 + $0x68] sm:$0xff]
      %v526 = vld [vmem:[#allocation3 + $0x70] sm:$0xff]
      %v527 = vld [vmem:[#allocation3 + $0x78] sm:$0xff]
      %v528 = vld [vmem:[%s3] sm:$0x1]
      %v530 = vperm.slane %v528, 0
      %532 = vmatpush.msra.mxu0 %v527
      %533 = vmatpush.msra.mxu0 %v526
      %534 = vmatpush.msra.mxu0 %v525
      %535 = vmatpush.msra.mxu0 %v524
      %536 = vmatpush.msra.mxu0 %v523
      %537 = vmatpush.msra.mxu0 %v522
      %538 = vmatpush.msra.mxu0 %v521
      %539 = vmatpush.msra.mxu0 %v520
      %540 = vmatpush.msra.mxu0 %v519
      %541 = vmatpush.msra.mxu0 %v518
      %542 = vmatpush.msra.mxu0 %v517
      %543 = vmatpush.msra.mxu0 %v516
      %544 = vmatpush.msra.mxu0 %v515
      %545 = vmatpush.msra.mxu0 %v514
      %546 = vmatpush.msra.mxu0 %v513
      %547 = vmatpush.msra.mxu0 %v512
      %548 = vmatmul.f32.gmra.mxu0 %v511
      %v549 = vpop.f32.mrf.mxu0
      %v550 = vadd.f32 %v530, %v549
      %551 = vdwg.mxu0
      %552 = vst [vmem:[#allocation6] sm:$0xff] %v550
    $region33: #{tpu_custom_call.1} parent=1 // pred_fallthru
      _
    // Predicated region
    $region34: #{tpu_custom_call.1} parent=1 // pred_check
      _
    $region35: #{tpu_custom_call.1} parent=1 // pred_check_branch
      %554 = sbr.rel (0) target = $region37
    $region36: #{tpu_custom_call.1} parent=1 // pred_region
      %556 = vsyncadd [#allocation5], 0
      %s558 = sshll.u32 [#allocation6], 4
      %s559 = int_to_ptr.vmem [resolvable:$true] %s558
      %s560 = sshll.u32 %s4, 4
      %s561 = int_to_ptr.hbm [resolvable:$true] %s560
      %563 = dma.vmem_to_hbm [thread:$0]  %s559, 128, %s561, [#allocation5]
    $region37: #{tpu_custom_call.1} parent=1 // pred_fallthru
      _
    // Predicated region
    $region38: #{tpu_custom_call.1} parent=1 // pred_check
      _
    $region39: #{tpu_custom_call.1} parent=1 // pred_check_branch
      %565 = sbr.rel (0) target = $region41
    $region40: #{tpu_custom_call.1} parent=1 // pred_region
      %567 = dma.done [#allocation5], 128
    $region41: #{tpu_custom_call.1} parent=1 // pred_fallthru
      _
    %568 = vsyncpa [#allocation4], 1
    %569 = vsyncpa [#allocation5], 1

</llo_original>
